<compile_context>
chip_gen: v6e
topology: v6e:2x2x1
jax: 0.10.0
libtpu: 0.0.40
codegen_flags: <defaults>
</compile_context>

<pallas_src>
import jax
import jax.numpy as jnp
from jax import lax
from jax.experimental import pallas as pl
from jax.experimental.pallas import tpu as pltpu


_SUBLANE = 8   # vreg sublane granularity (second-to-last dim)


def _round_up(n, m):
    return ((n + m - 1) // m) * m


def _dict_dense_kernel(x_ref, wc_ref, o_ref):
    # x_ref: (tile_m, K=4)   wc_ref: (K=4, N=2)   o_ref: (tile_m, N=2)
    # Single small contraction; full-f32 precision so the folded-weight result
    # matches the unfused chain to f32 rounding.
    o_ref[...] = jnp.dot(
        x_ref[...], wc_ref[...],
        preferred_element_type=jnp.float32,
        precision=lax.Precision.HIGHEST)


def _preferred_dimension_semantics():
    # Only core-parallel actually changes codegen; use it on v7x (2 TCs/chip),
    # plain "parallel" elsewhere (single TensorCore per chip on v5e/v6e).
    try:
        kind = jax.devices()[0].device_kind.lower()
    except Exception:
        kind = ""
    if "v7" in kind or "tpu7" in kind:
        return (pltpu.CORE_PARALLEL,)
    return ("parallel",)


def dict_dense_pallas(x, w1, w2, w3, *, max_tile_m=1024):
    """((x @ w1) @ w2) @ w3 — weights folded on host, row-tiled Pallas kernel."""
    x = x.astype(jnp.float32)
    w1 = w1.astype(jnp.float32)
    w2 = w2.astype(jnp.float32)
    w3 = w3.astype(jnp.float32)

    M, K = x.shape
    assert w1.shape[0] == K, "x / linear1 shape mismatch"
    assert w2.shape[0] == w1.shape[1] and w3.shape[0] == w2.shape[1], \
        "shape mismatch in matmul chain"
    N = w3.shape[1]

    # Fold the weight chain once on the host (exact by associativity, O(1)).
    wc = jnp.dot(jnp.dot(w1, w2, precision=lax.Precision.HIGHEST), w3,
                 precision=lax.Precision.HIGHEST)                  # (K, N) = (4, 2)

    # Pad rows only up to a sublane multiple; never lane-pad K or N.
    Mp = _round_up(M, _SUBLANE)
    x_in = x if Mp == M else jnp.zeros((Mp, K), jnp.float32).at[:M].set(x)

    tile_m = min(_round_up(max_tile_m, _SUBLANE), Mp)
    grid = (pl.cdiv(Mp, tile_m),)

    flops = 2 * Mp * K * N
    bytes_accessed = 4 * (Mp * K + K * N + Mp * N)

    def build(dim_sem):
        return pl.pallas_call(
            _dict_dense_kernel,
            out_shape=jax.ShapeDtypeStruct((Mp, N), jnp.float32),
            grid=grid,
            in_specs=[
                pl.BlockSpec((tile_m, K), lambda i: (i, 0)),   # row tile of x (true K)
                pl.BlockSpec((K, N), lambda i: (0, 0)),        # folded weight, resident
            ],
            out_specs=pl.BlockSpec((tile_m, N), lambda i: (i, 0)),
            compiler_params=pltpu.CompilerParams(dimension_semantics=dim_sem),
            cost_estimate=pl.CostEstimate(
                flops=flops, transcendentals=0, bytes_accessed=bytes_accessed),
        )(x_in, wc)

    dim_sem = _preferred_dimension_semantics()
    try:
        out = jax.block_until_ready(build(dim_sem))
    except Exception:
        if dim_sem == ("parallel",):
            raise
        # Defensive fallback if core-parallel is rejected on this chip/runtime.
        out = jax.block_until_ready(build(("parallel",)))

    return out if Mp == M else out[:M]


def dict_dense_ref(x, w1, w2, w3):
    # Pure-JAX reference: the module's literal left-to-right chain, full f32.
    h = jnp.dot(x, w1, precision=lax.Precision.HIGHEST)
    h = jnp.dot(h, w2, precision=lax.Precision.HIGHEST)
    return jnp.dot(h, w3, precision=lax.Precision.HIGHEST)


if __name__ == "__main__":
    key = jax.random.PRNGKey(0)
    k_x, k1, k2, k3 = jax.random.split(key, 4)

    # Small, module-consistent shapes: forward requires x of shape (batch, 4).
    batch = 8
    x = jax.random.normal(k_x, (batch, 4), dtype=jnp.float32)
    w1 = jax.random.normal(k1, (4, 4), dtype=jnp.float32)   # params['linear1']
    w2 = jax.random.normal(k2, (4, 4), dtype=jnp.float32)   # params['linear2']
    w3 = jax.random.normal(k3, (4, 2), dtype=jnp.float32)   # params['linear3']

    out = dict_dense_pallas(x, w1, w2, w3)
    out = jax.block_until_ready(out)

    ref = dict_dense_ref(x, w1, w2, w3)
    assert out.shape == (batch, 2), out.shape
    assert out.dtype == jnp.float32, out.dtype
    assert jnp.allclose(out, ref, atol=1e-4, rtol=1e-4), "mismatch vs reference"

    print("KERNEL_OK")
</pallas_src>

<mosaic_0001>
module attributes {stable_mosaic.version = 11 : i64} {
  func.func @_dict_dense_kernel(%arg0: i32, %arg1: memref<8x4xf32, #tpu.memory_space<vmem>>, %arg2: memref<4x2xf32, #tpu.memory_space<vmem>>, %arg3: memref<8x2xf32, #tpu.memory_space<vmem>>) attributes {dimension_semantics = [#tpu.dimension_semantics<parallel>], iteration_bounds = array<i64: 1>, scalar_prefetch = 0 : i64, scratch_operands = 0 : i64, tpu.core_type = #tpu.core_type<tc>, window_params = [{transform_indices = @transform_0, window_bounds = array<i64: 8, 4>}, {pipeline_mode = #tpu.pipeline_mode<synchronous>, transform_indices = @transform_1, window_bounds = array<i64: 4, 2>}, {transform_indices = @transform_2, window_bounds = array<i64: 8, 2>}]} {
    %c0 = arith.constant 0 : index
    %c0_0 = arith.constant 0 : index
    %0 = vector.load %arg1[%c0, %c0_0] : memref<8x4xf32, #tpu.memory_space<vmem>>, vector<8x4xf32>
    %c0_1 = arith.constant 0 : index
    %c0_2 = arith.constant 0 : index
    %1 = vector.load %arg2[%c0_1, %c0_2] : memref<4x2xf32, #tpu.memory_space<vmem>>, vector<4x2xf32>
    %cst = arith.constant dense<0.000000e+00> : vector<8x2xf32>
    %2 = tpu.matmul %0, %1, %cst {dimension_numbers = #tpu.dot_dimension_numbers<[1], [0], [0], [1], [0, 0, 1, 1], [], []>, precision = #tpu.contract_precision<fp32>} : vector<8x4xf32>, vector<4x2xf32>, vector<8x2xf32> -> vector<8x2xf32>
    %c0_3 = arith.constant 0 : index
    %c0_4 = arith.constant 0 : index
    %3 = vector.load %arg3[%c0_3, %c0_4] : memref<8x2xf32, #tpu.memory_space<vmem>>, vector<8x2xf32>
    tpu.vector_store %arg3[%c0_3, %c0_4], %2 {strides = array<i32>} : memref<8x2xf32, #tpu.memory_space<vmem>>, vector<8x2xf32>,
    return
  }
  func.func @transform_0(%arg0: i32) -> (i32, i32) {
    %c0_i32 = arith.constant 0 : i32
    %c0_i32_0 = arith.constant 0 : i32
    return %arg0, %c0_i32 : i32, i32
  }
  func.func @transform_1(%arg0: i32) -> (i32, i32) {
    %c0_i32 = arith.constant 0 : i32
    %c0_i32_0 = arith.constant 0 : i32
    %c0_i32_1 = arith.constant 0 : i32
    return %c0_i32, %c0_i32_0 : i32, i32
  }
  func.func @transform_2(%arg0: i32) -> (i32, i32) {
    %c0_i32 = arith.constant 0 : i32
    %c0_i32_0 = arith.constant 0 : i32
    return %arg0, %c0_i32 : i32, i32
  }
}

</mosaic_0001>

<llo_original>
// kernel: tpu_custom_call.1
$region0: #{tpu_custom_call.1}
  #allocation0 [shape = 'u32[]', space=smem, size = 0x4, offset = 0x4, fixed_abs, tag = 'smem constant byte address 0x4 - core index']
  #allocation1 [shape = 'u32[144,128]{1,0:T(1,128)}', space=vmem, size = 0x12000, scoped, tag = 'internal scratch']
  %s0 = inlined_call_operand.vmem [shape: f32[8,4], index: 0, kind: input, shape index: {}]
  %s1 = inlined_call_operand.vmem [shape: f32[4,2], index: 1, kind: input, shape index: {}]
  %s2 = inlined_call_operand.vmem [shape: f32[8,2], index: 2, kind: output, shape index: {}]
  %s3 = sld [smem:[#allocation0]]
  $region18: #{tpu_custom_call.1} parent=0
    _
  %s5 = ssub.s32 1, %s3
  %s6 = scalar_select 0, %s5, %s3
  // Predicated region
  $region2: #{tpu_custom_call.1} parent=0 // pred_check
    _
  $region3: #{tpu_custom_call.1} parent=0 // pred_check_branch
    %8 = sbr.rel (0) target = $region5
  $region4: #{tpu_custom_call.1} parent=0 // pred_region
    _
  $region5: #{tpu_custom_call.1} parent=0 // pred_fallthru
    _
  // Predicated region
  $region6: #{tpu_custom_call.1} parent=0 // pred_check
    _
  $region7: #{tpu_custom_call.1} parent=0 // pred_check_branch
    %10 = sbr.rel (0) target = $region9
  $region8: #{tpu_custom_call.1} parent=0 // pred_region
    _
  $region9: #{tpu_custom_call.1} parent=0 // pred_fallthru
    _
  %v11 = vld [vmem:[%s0] sm:$0xff]
  %v12 = vld [vmem:[%s1] sm:$0xf]
  %vm13 = vcmask 31744
  %v15 = vsel %vm13, %v11, 0
  %vm17 = vcmask 1043456
  %v19 = vsel %vm17, %v12, 0
  %21 = vmatprep.subr.mxu0 0.0
  %22 = vmatpush1.msra.mxu0 0.0
  %23 = vmatprep.subr.mxu0 0.0
  %24 = vmatpush1.msra.mxu0 0.0
  %25 = vmatprep.subr.mxu0 0.0
  %26 = vmatpush1.msra.mxu0 0.0
  %27 = vmatprep.subr.mxu0 0.0
  %28 = vmatpush1.msra.mxu0 0.0
  %29 = vmatprep.subr.mxu0 0.0
  %30 = vmatpush1.msra.mxu0 0.0
  %31 = vmatprep.subr.mxu0 0.0
  %32 = vmatpush1.msra.mxu0 0.0
  %33 = vmatprep.subr.mxu0 0.0
  %34 = vmatpush1.msra.mxu0 0.0
  %35 = vmatprep.subr.mxu0 0.0
  %36 = vmatpush1.msra.mxu0 0.0
  %37 = vmatprep.subr.mxu0 0.0
  %38 = vmatpush1.msra.mxu0 0.0
  %39 = vmatprep.subr.mxu0 0.0
  %40 = vmatpush1.msra.mxu0 0.0
  %41 = vmatprep.subr.mxu0 0.0
  %42 = vmatpush1.msra.mxu0 0.0
  %43 = vmatprep.subr.mxu0 0.0
  %44 = vmatpush1.msra.mxu0 0.0
  %45 = vmatprep.subr.mxu0 0.0
  %46 = vmatpush1.msra.mxu0 0.0
  %47 = vmatprep.subr.mxu0 0.0
  %48 = vmatpush1.msra.mxu0 0.0
  %49 = vmatprep.subr.mxu0 0.0
  %50 = vmatpush1.msra.mxu0 0.0
  %51 = vmatprep.subr.mxu0 0.0
  %v52 = vand.u32 %v19, 4294901760
  %53 = vmatpush1.msra.mxu0 %v52
  %54 = vmatprep.subr.mxu0 0.0
  %55 = vmatpush2.msra.mxu0 0.0
  %56 = vmatprep.subr.mxu0 0.0
  %57 = vmatpush2.msra.mxu0 0.0
  %58 = vmatprep.subr.mxu0 0.0
  %59 = vmatpush2.msra.mxu0 0.0
  %60 = vmatprep.subr.mxu0 0.0
  %61 = vmatpush2.msra.mxu0 0.0
  %62 = vmatprep.subr.mxu0 0.0
  %63 = vmatpush2.msra.mxu0 0.0
  %64 = vmatprep.subr.mxu0 0.0
  %65 = vmatpush2.msra.mxu0 0.0
  %66 = vmatprep.subr.mxu0 0.0
  %67 = vmatpush2.msra.mxu0 0.0
  %68 = vmatprep.subr.mxu0 0.0
  %69 = vmatpush2.msra.mxu0 0.0
  %70 = vmatprep.subr.mxu0 0.0
  %71 = vmatpush2.msra.mxu0 0.0
  %72 = vmatprep.subr.mxu0 0.0
  %73 = vmatpush2.msra.mxu0 0.0
  %74 = vmatprep.subr.mxu0 0.0
  %75 = vmatpush2.msra.mxu0 0.0
  %76 = vmatprep.subr.mxu0 0.0
  %77 = vmatpush2.msra.mxu0 0.0
  %78 = vmatprep.subr.mxu0 0.0
  %79 = vmatpush2.msra.mxu0 0.0
  %80 = vmatprep.subr.mxu0 0.0
  %81 = vmatpush2.msra.mxu0 0.0
  %82 = vmatprep.subr.mxu0 0.0
  %83 = vmatpush2.msra.mxu0 0.0
  %84 = vmatprep.subr.mxu0 0.0
  %85 = vmatpush2.msra.mxu0 0.0
  %86 = vmatprep.mubr.f32.mxu0 0.0
  %v87 = vand.u32 %v15, 4294901760
  %v88 = vsub.f32 %v15, %v87
  %v89 = vand.u32 %v88, 4294901760
  %v90 = vsub.f32 %v88, %v89
  %v91 = vand.u32 %v90, 4294901760
  %92 = vmatmul.mubr.f32.gmra.mxu0 %v91
  %v93 = vpop.f32.mrf.mxu0
  %v94 = vadd.f32 0.0, %v93
  %v95 = vpop.f32.mrf.mxu0
  %96 = vdwg.mxu0
  %97 = vmatprep.subr.mxu0 0.0
  %98 = vmatpush1.msra.mxu0 0.0
  %99 = vmatprep.subr.mxu0 0.0
  %100 = vmatpush1.msra.mxu0 0.0
  %101 = vmatprep.subr.mxu0 0.0
  %102 = vmatpush1.msra.mxu0 0.0
  %103 = vmatprep.subr.mxu0 0.0
  %104 = vmatpush1.msra.mxu0 0.0
  %105 = vmatprep.subr.mxu0 0.0
  %106 = vmatpush1.msra.mxu0 0.0
  %107 = vmatprep.subr.mxu0 0.0
  %108 = vmatpush1.msra.mxu0 0.0
  %109 = vmatprep.subr.mxu0 0.0
  %110 = vmatpush1.msra.mxu0 0.0
  %111 = vmatprep.subr.mxu0 0.0
  %112 = vmatpush1.msra.mxu0 0.0
  %113 = vmatprep.subr.mxu0 0.0
  %114 = vmatpush1.msra.mxu0 0.0
  %115 = vmatprep.subr.mxu0 0.0
  %116 = vmatpush1.msra.mxu0 0.0
  %117 = vmatprep.subr.mxu0 0.0
  %118 = vmatpush1.msra.mxu0 0.0
  %119 = vmatprep.subr.mxu0 0.0
  %120 = vmatpush1.msra.mxu0 0.0
  %121 = vmatprep.subr.mxu0 0.0
  %122 = vmatpush1.msra.mxu0 0.0
  %123 = vmatprep.subr.mxu0 0.0
  %124 = vmatpush1.msra.mxu0 0.0
  %125 = vmatprep.subr.mxu0 0.0
  %126 = vmatpush1.msra.mxu0 0.0
  %127 = vmatprep.subr.mxu0 0.0
  %v128 = vand.u32 %v19, 4294901760
  %v129 = vsub.f32 %v19, %v128
  %v130 = vand.u32 %v129, 4294901760
  %v131 = vsub.f32 %v129, %v130
  %v132 = vand.u32 %v131, 4294901760
  %133 = vmatpush1.msra.mxu0 %v132
  %134 = vmatprep.subr.mxu0 0.0
  %135 = vmatpush2.msra.mxu0 0.0
  %136 = vmatprep.subr.mxu0 0.0
  %137 = vmatpush2.msra.mxu0 0.0
  %138 = vmatprep.subr.mxu0 0.0
  %139 = vmatpush2.msra.mxu0 0.0
  %140 = vmatprep.subr.mxu0 0.0
  %141 = vmatpush2.msra.mxu0 0.0
  %142 = vmatprep.subr.mxu0 0.0
  %143 = vmatpush2.msra.mxu0 0.0
  %144 = vmatprep.subr.mxu0 0.0
  %145 = vmatpush2.msra.mxu0 0.0
  %146 = vmatprep.subr.mxu0 0.0
  %147 = vmatpush2.msra.mxu0 0.0
  %148 = vmatprep.subr.mxu0 0.0
  %149 = vmatpush2.msra.mxu0 0.0
  %150 = vmatprep.subr.mxu0 0.0
  %151 = vmatpush2.msra.mxu0 0.0
  %152 = vmatprep.subr.mxu0 0.0
  %153 = vmatpush2.msra.mxu0 0.0
  %154 = vmatprep.subr.mxu0 0.0
  %155 = vmatpush2.msra.mxu0 0.0
  %156 = vmatprep.subr.mxu0 0.0
  %157 = vmatpush2.msra.mxu0 0.0
  %158 = vmatprep.subr.mxu0 0.0
  %159 = vmatpush2.msra.mxu0 0.0
  %160 = vmatprep.subr.mxu0 0.0
  %161 = vmatpush2.msra.mxu0 0.0
  %162 = vmatprep.subr.mxu0 0.0
  %163 = vmatpush2.msra.mxu0 0.0
  %164 = vmatprep.subr.mxu0 0.0
  %165 = vmatpush2.msra.mxu0 0.0
  %166 = vmatprep.mubr.f32.mxu0 0.0
  %v167 = vand.u32 %v15, 4294901760
  %168 = vmatmul.mubr.f32.gmra.mxu0 %v167
  %v169 = vpop.f32.mrf.mxu0
  %v170 = vadd.f32 %v94, %v169
  %v171 = vpop.f32.mrf.mxu0
  %172 = vdwg.mxu0
  %173 = vmatprep.subr.mxu0 0.0
  %174 = vmatpush1.msra.mxu0 0.0
  %175 = vmatprep.subr.mxu0 0.0
  %176 = vmatpush1.msra.mxu0 0.0
  %177 = vmatprep.subr.mxu0 0.0
  %178 = vmatpush1.msra.mxu0 0.0
  %179 = vmatprep.subr.mxu0 0.0
  %180 = vmatpush1.msra.mxu0 0.0
  %181 = vmatprep.subr.mxu0 0.0
  %182 = vmatpush1.msra.mxu0 0.0
  %183 = vmatprep.subr.mxu0 0.0
  %184 = vmatpush1.msra.mxu0 0.0
  %185 = vmatprep.subr.mxu0 0.0
  %186 = vmatpush1.msra.mxu0 0.0
  %187 = vmatprep.subr.mxu0 0.0
  %188 = vmatpush1.msra.mxu0 0.0
  %189 = vmatprep.subr.mxu0 0.0
  %190 = vmatpush1.msra.mxu0 0.0
  %191 = vmatprep.subr.mxu0 0.0
  %192 = vmatpush1.msra.mxu0 0.0
  %193 = vmatprep.subr.mxu0 0.0
  %194 = vmatpush1.msra.mxu0 0.0
  %195 = vmatprep.subr.mxu0 0.0
  %196 = vmatpush1.msra.mxu0 0.0
  %197 = vmatprep.subr.mxu0 0.0
  %198 = vmatpush1.msra.mxu0 0.0
  %199 = vmatprep.subr.mxu0 0.0
  %200 = vmatpush1.msra.mxu0 0.0
  %201 = vmatprep.subr.mxu0 0.0
  %202 = vmatpush1.msra.mxu0 0.0
  %203 = vmatprep.subr.mxu0 0.0
  %v204 = vand.u32 %v19, 4294901760
  %v205 = vsub.f32 %v19, %v204
  %206 = vmatpush1.msra.mxu0 %v205
  %207 = vmatprep.subr.mxu0 0.0
  %208 = vmatpush2.msra.mxu0 0.0
  %209 = vmatprep.subr.mxu0 0.0
  %210 = vmatpush2.msra.mxu0 0.0
  %211 = vmatprep.subr.mxu0 0.0
  %212 = vmatpush2.msra.mxu0 0.0
  %213 = vmatprep.subr.mxu0 0.0
  %214 = vmatpush2.msra.mxu0 0.0
  %215 = vmatprep.subr.mxu0 0.0
  %216 = vmatpush2.msra.mxu0 0.0
  %217 = vmatprep.subr.mxu0 0.0
  %218 = vmatpush2.msra.mxu0 0.0
  %219 = vmatprep.subr.mxu0 0.0
  %220 = vmatpush2.msra.mxu0 0.0
  %221 = vmatprep.subr.mxu0 0.0
  %222 = vmatpush2.msra.mxu0 0.0
  %223 = vmatprep.subr.mxu0 0.0
  %224 = vmatpush2.msra.mxu0 0.0
  %225 = vmatprep.subr.mxu0 0.0
  %226 = vmatpush2.msra.mxu0 0.0
  %227 = vmatprep.subr.mxu0 0.0
  %228 = vmatpush2.msra.mxu0 0.0
  %229 = vmatprep.subr.mxu0 0.0
  %230 = vmatpush2.msra.mxu0 0.0
  %231 = vmatprep.subr.mxu0 0.0
  %232 = vmatpush2.msra.mxu0 0.0
  %233 = vmatprep.subr.mxu0 0.0
  %234 = vmatpush2.msra.mxu0 0.0
  %235 = vmatprep.subr.mxu0 0.0
  %236 = vmatpush2.msra.mxu0 0.0
  %237 = vmatprep.subr.mxu0 0.0
  %238 = vmatpush2.msra.mxu0 0.0
  %239 = vmatprep.mubr.f32.mxu0 0.0
  %v240 = vand.u32 %v15, 4294901760
  %v241 = vsub.f32 %v15, %v240
  %242 = vmatmul.mubr.f32.gmra.mxu0 %v241
  %v243 = vpop.f32.mrf.mxu0
  %v244 = vadd.f32 %v170, %v243
  %v245 = vpop.f32.mrf.mxu0
  %246 = vdwg.mxu0
  %247 = vmatprep.subr.mxu0 0.0
  %248 = vmatpush1.msra.mxu0 0.0
  %249 = vmatprep.subr.mxu0 0.0
  %250 = vmatpush1.msra.mxu0 0.0
  %251 = vmatprep.subr.mxu0 0.0
  %252 = vmatpush1.msra.mxu0 0.0
  %253 = vmatprep.subr.mxu0 0.0
  %254 = vmatpush1.msra.mxu0 0.0
  %255 = vmatprep.subr.mxu0 0.0
  %256 = vmatpush1.msra.mxu0 0.0
  %257 = vmatprep.subr.mxu0 0.0
  %258 = vmatpush1.msra.mxu0 0.0
  %259 = vmatprep.subr.mxu0 0.0
  %260 = vmatpush1.msra.mxu0 0.0
  %261 = vmatprep.subr.mxu0 0.0
  %262 = vmatpush1.msra.mxu0 0.0
  %263 = vmatprep.subr.mxu0 0.0
  %264 = vmatpush1.msra.mxu0 0.0
  %265 = vmatprep.subr.mxu0 0.0
  %266 = vmatpush1.msra.mxu0 0.0
  %267 = vmatprep.subr.mxu0 0.0
  %268 = vmatpush1.msra.mxu0 0.0
  %269 = vmatprep.subr.mxu0 0.0
  %270 = vmatpush1.msra.mxu0 0.0
  %271 = vmatprep.subr.mxu0 0.0
  %272 = vmatpush1.msra.mxu0 0.0
  %273 = vmatprep.subr.mxu0 0.0
  %274 = vmatpush1.msra.mxu0 0.0
  %275 = vmatprep.subr.mxu0 0.0
  %276 = vmatpush1.msra.mxu0 0.0
  %277 = vmatprep.subr.mxu0 0.0
  %v278 = vand.u32 %v19, 4294901760
  %279 = vmatpush1.msra.mxu0 %v278
  %280 = vmatprep.subr.mxu0 0.0
  %281 = vmatpush2.msra.mxu0 0.0
  %282 = vmatprep.subr.mxu0 0.0
  %283 = vmatpush2.msra.mxu0 0.0
  %284 = vmatprep.subr.mxu0 0.0
  %285 = vmatpush2.msra.mxu0 0.0
  %286 = vmatprep.subr.mxu0 0.0
  %287 = vmatpush2.msra.mxu0 0.0
  %288 = vmatprep.subr.mxu0 0.0
  %289 = vmatpush2.msra.mxu0 0.0
  %290 = vmatprep.subr.mxu0 0.0
  %291 = vmatpush2.msra.mxu0 0.0
  %292 = vmatprep.subr.mxu0 0.0
  %293 = vmatpush2.msra.mxu0 0.0
  %294 = vmatprep.subr.mxu0 0.0
  %295 = vmatpush2.msra.mxu0 0.0
  %296 = vmatprep.subr.mxu0 0.0
  %297 = vmatpush2.msra.mxu0 0.0
  %298 = vmatprep.subr.mxu0 0.0
  %299 = vmatpush2.msra.mxu0 0.0
  %300 = vmatprep.subr.mxu0 0.0
  %301 = vmatpush2.msra.mxu0 0.0
  %302 = vmatprep.subr.mxu0 0.0
  %303 = vmatpush2.msra.mxu0 0.0
  %304 = vmatprep.subr.mxu0 0.0
  %305 = vmatpush2.msra.mxu0 0.0
  %306 = vmatprep.subr.mxu0 0.0
  %307 = vmatpush2.msra.mxu0 0.0
  %308 = vmatprep.subr.mxu0 0.0
  %309 = vmatpush2.msra.mxu0 0.0
  %310 = vmatprep.subr.mxu0 0.0
  %311 = vmatpush2.msra.mxu0 0.0
  %312 = vmatprep.mubr.f32.mxu0 0.0
  %v313 = vand.u32 %v15, 4294901760
  %v314 = vsub.f32 %v15, %v313
  %v315 = vand.u32 %v314, 4294901760
  %316 = vmatmul.mubr.f32.gmra.mxu0 %v315
  %v317 = vpop.f32.mrf.mxu0
  %v318 = vadd.f32 %v244, %v317
  %v319 = vpop.f32.mrf.mxu0
  %320 = vdwg.mxu0
  %321 = vmatprep.subr.mxu0 0.0
  %322 = vmatpush1.msra.mxu0 0.0
  %323 = vmatprep.subr.mxu0 0.0
  %324 = vmatpush1.msra.mxu0 0.0
  %325 = vmatprep.subr.mxu0 0.0
  %326 = vmatpush1.msra.mxu0 0.0
  %327 = vmatprep.subr.mxu0 0.0
  %328 = vmatpush1.msra.mxu0 0.0
  %329 = vmatprep.subr.mxu0 0.0
  %330 = vmatpush1.msra.mxu0 0.0
  %331 = vmatprep.subr.mxu0 0.0
  %332 = vmatpush1.msra.mxu0 0.0
  %333 = vmatprep.subr.mxu0 0.0
  %334 = vmatpush1.msra.mxu0 0.0
  %335 = vmatprep.subr.mxu0 0.0
  %336 = vmatpush1.msra.mxu0 0.0
  %337 = vmatprep.subr.mxu0 0.0
  %338 = vmatpush1.msra.mxu0 0.0
  %339 = vmatprep.subr.mxu0 0.0
  %340 = vmatpush1.msra.mxu0 0.0
  %341 = vmatprep.subr.mxu0 0.0
  %342 = vmatpush1.msra.mxu0 0.0
  %343 = vmatprep.subr.mxu0 0.0
  %344 = vmatpush1.msra.mxu0 0.0
  %345 = vmatprep.subr.mxu0 0.0
  %346 = vmatpush1.msra.mxu0 0.0
  %347 = vmatprep.subr.mxu0 0.0
  %348 = vmatpush1.msra.mxu0 0.0
  %349 = vmatprep.subr.mxu0 0.0
  %350 = vmatpush1.msra.mxu0 0.0
  %351 = vmatprep.subr.mxu0 0.0
  %v352 = vand.u32 %v19, 4294901760
  %v353 = vsub.f32 %v19, %v352
  %v354 = vand.u32 %v353, 4294901760
  %355 = vmatpush1.msra.mxu0 %v354
  %356 = vmatprep.subr.mxu0 0.0
  %357 = vmatpush2.msra.mxu0 0.0
  %358 = vmatprep.subr.mxu0 0.0
  %359 = vmatpush2.msra.mxu0 0.0
  %360 = vmatprep.subr.mxu0 0.0
  %361 = vmatpush2.msra.mxu0 0.0
  %362 = vmatprep.subr.mxu0 0.0
  %363 = vmatpush2.msra.mxu0 0.0
  %364 = vmatprep.subr.mxu0 0.0
  %365 = vmatpush2.msra.mxu0 0.0
  %366 = vmatprep.subr.mxu0 0.0
  %367 = vmatpush2.msra.mxu0 0.0
  %368 = vmatprep.subr.mxu0 0.0
  %369 = vmatpush2.msra.mxu0 0.0
  %370 = vmatprep.subr.mxu0 0.0
  %371 = vmatpush2.msra.mxu0 0.0
  %372 = vmatprep.subr.mxu0 0.0
  %373 = vmatpush2.msra.mxu0 0.0
  %374 = vmatprep.subr.mxu0 0.0
  %375 = vmatpush2.msra.mxu0 0.0
  %376 = vmatprep.subr.mxu0 0.0
  %377 = vmatpush2.msra.mxu0 0.0
  %378 = vmatprep.subr.mxu0 0.0
  %379 = vmatpush2.msra.mxu0 0.0
  %380 = vmatprep.subr.mxu0 0.0
  %381 = vmatpush2.msra.mxu0 0.0
  %382 = vmatprep.subr.mxu0 0.0
  %383 = vmatpush2.msra.mxu0 0.0
  %384 = vmatprep.subr.mxu0 0.0
  %385 = vmatpush2.msra.mxu0 0.0
  %386 = vmatprep.subr.mxu0 0.0
  %387 = vmatpush2.msra.mxu0 0.0
  %388 = vmatprep.mubr.f32.mxu0 0.0
  %v389 = vand.u32 %v15, 4294901760
  %390 = vmatmul.mubr.f32.gmra.mxu0 %v389
  %v391 = vpop.f32.mrf.mxu0
  %v392 = vadd.f32 %v318, %v391
  %v393 = vpop.f32.mrf.mxu0
  %394 = vdwg.mxu0
  %395 = vmatprep.subr.mxu0 0.0
  %396 = vmatpush1.msra.mxu0 0.0
  %397 = vmatprep.subr.mxu0 0.0
  %398 = vmatpush1.msra.mxu0 0.0
  %399 = vmatprep.subr.mxu0 0.0
  %400 = vmatpush1.msra.mxu0 0.0
  %401 = vmatprep.subr.mxu0 0.0
  %402 = vmatpush1.msra.mxu0 0.0
  %403 = vmatprep.subr.mxu0 0.0
  %404 = vmatpush1.msra.mxu0 0.0
  %405 = vmatprep.subr.mxu0 0.0
  %406 = vmatpush1.msra.mxu0 0.0
  %407 = vmatprep.subr.mxu0 0.0
  %408 = vmatpush1.msra.mxu0 0.0
  %409 = vmatprep.subr.mxu0 0.0
  %410 = vmatpush1.msra.mxu0 0.0
  %411 = vmatprep.subr.mxu0 0.0
  %412 = vmatpush1.msra.mxu0 0.0
  %413 = vmatprep.subr.mxu0 0.0
  %414 = vmatpush1.msra.mxu0 0.0
  %415 = vmatprep.subr.mxu0 0.0
  %416 = vmatpush1.msra.mxu0 0.0
  %417 = vmatprep.subr.mxu0 0.0
  %418 = vmatpush1.msra.mxu0 0.0
  %419 = vmatprep.subr.mxu0 0.0
  %420 = vmatpush1.msra.mxu0 0.0
  %421 = vmatprep.subr.mxu0 0.0
  %422 = vmatpush1.msra.mxu0 0.0
  %423 = vmatprep.subr.mxu0 0.0
  %424 = vmatpush1.msra.mxu0 0.0
  %425 = vmatprep.subr.mxu0 0.0
  %v426 = vand.u32 %v19, 4294901760
  %427 = vmatpush1.msra.mxu0 %v426
  %428 = vmatprep.subr.mxu0 0.0
  %429 = vmatpush2.msra.mxu0 0.0
  %430 = vmatprep.subr.mxu0 0.0
  %431 = vmatpush2.msra.mxu0 0.0
  %432 = vmatprep.subr.mxu0 0.0
  %433 = vmatpush2.msra.mxu0 0.0
  %434 = vmatprep.subr.mxu0 0.0
  %435 = vmatpush2.msra.mxu0 0.0
  %436 = vmatprep.subr.mxu0 0.0
  %437 = vmatpush2.msra.mxu0 0.0
  %438 = vmatprep.subr.mxu0 0.0
  %439 = vmatpush2.msra.mxu0 0.0
  %440 = vmatprep.subr.mxu0 0.0
  %441 = vmatpush2.msra.mxu0 0.0
  %442 = vmatprep.subr.mxu0 0.0
  %443 = vmatpush2.msra.mxu0 0.0
  %444 = vmatprep.subr.mxu0 0.0
  %445 = vmatpush2.msra.mxu0 0.0
  %446 = vmatprep.subr.mxu0 0.0
  %447 = vmatpush2.msra.mxu0 0.0
  %448 = vmatprep.subr.mxu0 0.0
  %449 = vmatpush2.msra.mxu0 0.0
  %450 = vmatprep.subr.mxu0 0.0
  %451 = vmatpush2.msra.mxu0 0.0
  %452 = vmatprep.subr.mxu0 0.0
  %453 = vmatpush2.msra.mxu0 0.0
  %454 = vmatprep.subr.mxu0 0.0
  %455 = vmatpush2.msra.mxu0 0.0
  %456 = vmatprep.subr.mxu0 0.0
  %457 = vmatpush2.msra.mxu0 0.0
  %458 = vmatprep.subr.mxu0 0.0
  %459 = vmatpush2.msra.mxu0 0.0
  %460 = vmatprep.mubr.f32.mxu0 0.0
  %v461 = vand.u32 %v15, 4294901760
  %462 = vmatmul.mubr.f32.gmra.mxu0 %v461
  %v463 = vpop.f32.mrf.mxu0
  %v464 = vadd.f32 %v392, %v463
  %v465 = vpop.f32.mrf.mxu0
  %466 = vdwg.mxu0
  %vm467 = vcmask 15360
  %468 = vst.msk [vmem:[%s2] sm:$0xff] %vm467, %v464
  // Predicated region
  $region10: #{tpu_custom_call.1} parent=0 // pred_check
    _
  $region11: #{tpu_custom_call.1} parent=0 // pred_check_branch
    %470 = sbr.rel (0) target = $region13
  $region12: #{tpu_custom_call.1} parent=0 // pred_region
    _
  $region13: #{tpu_custom_call.1} parent=0 // pred_fallthru
    _
  // Predicated region
  $region14: #{tpu_custom_call.1} parent=0 // pred_check
    _
  $region15: #{tpu_custom_call.1} parent=0 // pred_check_branch
    %472 = sbr.rel (0) target = $region17
  $region16: #{tpu_custom_call.1} parent=0 // pred_region
    _
  $region17: #{tpu_custom_call.1} parent=0 // pred_fallthru
    _

</llo_original>
